<compile_context>
chip_gen: v7x
topology: tpu7x:2x2x1
jax: 0.10.0
libtpu: 0.0.40
codegen_flags: <defaults>
</compile_context>

<pallas_src>
import math
from functools import partial

import jax
import jax.numpy as jnp
from jax import lax
from jax.experimental import pallas as pl
from jax.experimental.pallas import tpu as pltpu


# ---------------------------------------------------------------------------
# Configuration (small, consistent with the module)
# ---------------------------------------------------------------------------
CFG = dict(
    n_mel=16,
    residual_channels=32,
    conditioner_size=16,
    diffusion_fc_size=32,
    residual_layer_num=4,
    dilation_cycle_length=2,
    residual_kernel_size=3,
    noise_schedule_factors=(1e-4, 0.05, 100),   # -> max_steps = 100
)


# ---------------------------------------------------------------------------
# StepEncoder
# ---------------------------------------------------------------------------
def build_embedding(max_steps: int) -> jnp.ndarray:
    """Same formula as StepEncoder.build_embedding -> [max_steps, 128]."""
    steps = jnp.arange(max_steps, dtype=jnp.float32)[:, None]
    dims = jnp.arange(64, dtype=jnp.float32)[None, :]
    table = steps * (10.0 ** (dims * 4.0 / 63.0))
    return jnp.concatenate([jnp.sin(table), jnp.cos(table)], axis=1)


def _step_mlp_kernel(x_ref, w1_ref, b1_ref, w2_ref, b2_ref, out_ref):
    """Linear -> SiLU -> Linear -> SiLU on a [N, 128] slab."""
    x = x_ref[...]
    h = jnp.dot(x, w1_ref[...], preferred_element_type=jnp.float32) + b1_ref[...]
    h = h * jax.nn.sigmoid(h)                       # SiLU (sigmoid on EUP)
    y = jnp.dot(h, w2_ref[...], preferred_element_type=jnp.float32) + b2_ref[...]
    out_ref[...] = y * jax.nn.sigmoid(y)


def _run_step_mlp(sp, x2d):
    """x2d: [N, 128] f32 -> [N, FC] f32.  Used once at init on the full table."""
    n = x2d.shape[0]
    fc = sp["w1"].shape[1]
    flops = 2 * n * (128 * fc + fc * fc)
    bytes_acc = 4 * (x2d.size + sp["w1"].size + sp["w2"].size + 2 * fc + n * fc)
    return pl.pallas_call(
        _step_mlp_kernel,
        out_shape=jax.ShapeDtypeStruct((n, fc), jnp.float32),
        in_specs=[pl.BlockSpec(memory_space=pltpu.MemorySpace.VMEM)] * 5,
        out_specs=pl.BlockSpec(memory_space=pltpu.MemorySpace.VMEM),
        cost_estimate=pl.CostEstimate(
            flops=flops, transcendentals=2 * n * fc, bytes_accessed=bytes_acc),
    )(x2d, sp["w1"], sp["b1"], sp["w2"], sp["b2"])


def _step_lerp_mlp_kernel(t_ref, table_ref, w1_ref, b1_ref, w2_ref, b2_ref,
                          emb_ref, out_ref):
    """Fused clamped lerp-gather + MLP for float diffusion steps."""
    t = t_ref[...]                                  # [B, 1] f32
    n_rows = t.shape[0]
    n_steps = table_ref.shape[0]

    low_f = jnp.floor(t)
    frac = t - low_f                                # [B, 1]
    low = jnp.clip(low_f, 0.0, float(n_steps - 1)).astype(jnp.int32)
    high = jnp.clip(jnp.ceil(t), 0.0, float(n_steps - 1)).astype(jnp.int32)

    # Gather fused in-kernel as one-hot x table matmuls (MXU-friendly gather).
    ids = lax.broadcasted_iota(jnp.int32, (n_rows, n_steps), 1)
    low_oh = (ids == low).astype(jnp.float32)       # [B, T]
    high_oh = (ids == high).astype(jnp.float32)
    table = table_ref[...]
    low_e = jnp.dot(low_oh, table, preferred_element_type=jnp.float32)
    high_e = jnp.dot(high_oh, table, preferred_element_type=jnp.float32)
    emb = low_e + (high_e - low_e) * frac           # [B, 128]
    emb_ref[...] = emb

    h = jnp.dot(emb, w1_ref[...], preferred_element_type=jnp.float32) + b1_ref[...]
    h = h * jax.nn.sigmoid(h)
    y = jnp.dot(h, w2_ref[...], preferred_element_type=jnp.float32) + b2_ref[...]
    out_ref[...] = y * jax.nn.sigmoid(y)


def _run_step_lerp(sp, t2d):
    n = t2d.shape[0]
    n_steps, emb_dim = sp["embedding"].shape
    fc = sp["w1"].shape[1]
    flops = 2 * n * (2 * n_steps * emb_dim + emb_dim * fc + fc * fc)
    bytes_acc = 4 * (t2d.size + n_steps * emb_dim + sp["w1"].size + sp["w2"].size
                     + 2 * fc + n * (emb_dim + fc))
    return pl.pallas_call(
        _step_lerp_mlp_kernel,
        out_shape=(jax.ShapeDtypeStruct((n, emb_dim), jnp.float32),
                   jax.ShapeDtypeStruct((n, fc), jnp.float32)),
        in_specs=[pl.BlockSpec(memory_space=pltpu.MemorySpace.VMEM)] * 6,
        out_specs=(pl.BlockSpec(memory_space=pltpu.MemorySpace.VMEM),) * 2,
        cost_estimate=pl.CostEstimate(
            flops=flops, transcendentals=2 * n * fc, bytes_accessed=bytes_acc),
    )(t2d, sp["embedding"], sp["w1"], sp["b1"], sp["w2"], sp["b2"])


def step_encoder_forward(sp, cur_diffusion_step):
    """Matches StepEncoder.forward.  Returns ([..., FC], stats)."""
    lead = cur_diffusion_step.shape
    fc = sp["w1"].shape[1]
    if jnp.issubdtype(cur_diffusion_step.dtype, jnp.integer):
        # Integer path: both the embedding and the MLP output are precomputed
        # tables; runtime is just two gathers (no per-step Pallas dispatch).
        emb = sp["embedding"][cur_diffusion_step]           # [..., 128]
        out = sp["out_table"][cur_diffusion_step]           # [..., FC]
    else:
        t2d = cur_diffusion_step.reshape(-1, 1).astype(jnp.float32)
        emb2d, out2d = _run_step_lerp(sp, t2d)
        emb = emb2d.reshape(*lead, 128)
        out = out2d.reshape(*lead, fc)
    stats = {"step_embedding": emb, "step_encoder_output": out}
    return out, stats


# ---------------------------------------------------------------------------
# SpectrogramPreprocessor: transpose + 1x1 conv + ReLU, fused per batch
# ---------------------------------------------------------------------------
def _mel_pre_kernel(mel_ref, w_ref, b_ref, out_ref):
    # mel_ref: [L, n_mel], w_ref: [C, n_mel] -> out [C, L] (transpose fused in dot)
    h = lax.dot_general(w_ref[...], mel_ref[...],
                        (((1,), (1,)), ((), ())),
                        preferred_element_type=jnp.float32)
    out_ref[...] = jnp.maximum(h + b_ref[...], 0.0)


def mel_preprocess(pp, mel):
    batch, n_frames, n_mel = mel.shape
    n_ch = pp["w"].shape[0]
    return pl.pallas_call(
        _mel_pre_kernel,
        grid=(batch,),
        out_shape=jax.ShapeDtypeStruct((batch, n_ch, n_frames), jnp.float32),
        in_specs=[
            pl.BlockSpec((None, n_frames, n_mel), lambda b: (b, 0, 0)),
            pl.BlockSpec((n_ch, n_mel), lambda b: (0, 0)),
            pl.BlockSpec((n_ch, 1), lambda b: (0, 0)),
        ],
        out_specs=pl.BlockSpec((None, n_ch, n_frames), lambda b: (b, 0, 0)),
        compiler_params=pltpu.CompilerParams(dimension_semantics=("arbitrary",)),
    )(mel, pp["w"], pp["b"])


# ---------------------------------------------------------------------------
# ResidualBlock: fully fused per-layer kernel
# ---------------------------------------------------------------------------
def _shift_matrices(length, offsets):
    """S_off with (y @ S_off)[:, l] = y[:, l+off] (zero outside [0, L))."""
    mats = [jnp.eye(length, dtype=jnp.float32, k=-off) for off in offsets]
    return jnp.stack(mats, axis=0)                  # [K, L, L]


def _make_residual_kernel(n_ch, length, offsets, has_skip_in):
    inv_sqrt2 = 1.0 / math.sqrt(2.0)
    n_taps = len(offsets)

    def kernel(*refs):
        if has_skip_in:
            (x_ref, s_ref, cond_ref, skipin_ref,
             wd_ref, bd_ref, wdil_ref, bdil_ref,
             wcond_ref, bcond_ref, wout_ref, bout_ref, shift_ref,
             xnext_ref, skipout_ref, ystep_ref, ycond_ref) = refs
        else:
            (x_ref, s_ref, cond_ref,
             wd_ref, bd_ref, wdil_ref, bdil_ref,
             wcond_ref, bcond_ref, wout_ref, bout_ref, shift_ref,
             xnext_ref, skipout_ref, ystep_ref, ycond_ref) = refs
            skipin_ref = None

        x = x_ref[...]                                              # [C, L]

        # Fused diffusion_projection (Linear FC->C): [C,FC] @ [FC,1] -> [C,1]
        proj = jnp.dot(wd_ref[...], s_ref[...],
                       preferred_element_type=jnp.float32) + bd_ref[...]
        y = x + proj                                                # [C, L]
        ystep_ref[...] = y                                          # stats: noise_step

        # Dilated conv as shift-matrix matmuls (no unaligned lane shifts).
        acc = None
        for k in range(n_taps):
            if offsets[k] == 0:
                yk = y
            else:
                yk = jnp.dot(y, shift_ref[k], preferred_element_type=jnp.float32)
            term = jnp.dot(wdil_ref[k], yk, preferred_element_type=jnp.float32)
            acc = term if acc is None else acc + term
        conv = acc + bdil_ref[...]                                  # [2C, L]

        # Fused 1x1 conditioner conv.
        cond = jnp.dot(wcond_ref[...], cond_ref[...],
                       preferred_element_type=jnp.float32) + bcond_ref[...]
        z = conv + cond
        ycond_ref[...] = z                                          # stats: noise_step_condition

        gate = z[:n_ch, :]
        filt = z[n_ch:, :]
        g = jax.nn.sigmoid(gate) * jnp.tanh(filt)                   # [C, L]

        o = jnp.dot(wout_ref[...], g,
                    preferred_element_type=jnp.float32) + bout_ref[...]   # [2C, L]
        residual = o[:n_ch, :]
        skip = o[n_ch:, :]

        xnext_ref[...] = (x + residual) * inv_sqrt2
        skipout_ref[...] = skip if skipin_ref is None else skipin_ref[...] + skip

    return kernel


def residual_block_apply(lp, x, step_col, cond_t, skip_in, *, dilation, kernel_size):
    batch, n_ch, length = x.shape
    fc = step_col.shape[1]
    n_bin = cond_t.shape[1]
    n_taps = kernel_size

    if dilation == 1:
        padding = (kernel_size - 1) // 2
    else:
        assert kernel_size == 3
        padding = dilation
    offsets = tuple(k * dilation - padding for k in range(n_taps))
    shift = _shift_matrices(length, offsets)                    # [K, L, L] constants

    has_skip = skip_in is not None
    kern = _make_residual_kernel(n_ch, length, offsets, has_skip)

    per_b = lambda b: (b, 0, 0)
    full2 = lambda b: (0, 0)
    full3 = lambda b: (0, 0, 0)

    in_specs = [
        pl.BlockSpec((None, n_ch, length), per_b),              # x
        pl.BlockSpec((None, fc, 1), per_b),                     # step column
        pl.BlockSpec((None, n_bin, length), per_b),             # conditioner^T
    ]
    args = [x, step_col, cond_t]
    if has_skip:
        in_specs.append(pl.BlockSpec((None, n_ch, length), per_b))
        args.append(skip_in)
    in_specs += [
        pl.BlockSpec((n_ch, fc), full2),                        # wd
        pl.BlockSpec((n_ch, 1), full2),                         # bd
        pl.BlockSpec((n_taps, 2 * n_ch, n_ch), full3),          # wdil [K,2C,C]
        pl.BlockSpec((2 * n_ch, 1), full2),                     # bdil
        pl.BlockSpec((2 * n_ch, n_bin), full2),                 # wcond
        pl.BlockSpec((2 * n_ch, 1), full2),                     # bcond
        pl.BlockSpec((2 * n_ch, n_ch), full2),                  # wout
        pl.BlockSpec((2 * n_ch, 1), full2),                     # bout
        pl.BlockSpec((n_taps, length, length), full3),          # shift matrices
    ]
    args += [lp["wd"], lp["bd"], lp["wdil"], lp["bdil"],
             lp["wcond"], lp["bcond"], lp["wout"], lp["bout"], shift]

    out_shape = (
        jax.ShapeDtypeStruct((batch, n_ch, length), jnp.float32),       # x_next
        jax.ShapeDtypeStruct((batch, n_ch, length), jnp.float32),       # skip accum
        jax.ShapeDtypeStruct((batch, n_ch, length), jnp.float32),       # noise_step
        jax.ShapeDtypeStruct((batch, 2 * n_ch, length), jnp.float32),   # noise_step_condition
    )
    out_specs = (
        pl.BlockSpec((None, n_ch, length), per_b),
        pl.BlockSpec((None, n_ch, length), per_b),
        pl.BlockSpec((None, n_ch, length), per_b),
        pl.BlockSpec((None, 2 * n_ch, length), per_b),
    )

    flops = 2 * batch * (
        n_ch * fc
        + (n_taps - 1) * n_ch * length * length
        + n_taps * (2 * n_ch) * n_ch * length
        + (2 * n_ch) * n_bin * length
        + (2 * n_ch) * n_ch * length)
    bytes_acc = 4 * (sum(int(a.size) for a in args)
                     + sum(math.prod(s.shape) for s in out_shape))

    x_next, skip_out, ystep, ycond = pl.pallas_call(
        kern,
        grid=(batch,),
        out_shape=out_shape,
        in_specs=in_specs,
        out_specs=out_specs,
        compiler_params=pltpu.CompilerParams(dimension_semantics=("arbitrary",)),
        cost_estimate=pl.CostEstimate(
            flops=flops,
            transcendentals=batch * 2 * n_ch * length,
            bytes_accessed=bytes_acc),
    )(*args)
    return x_next, skip_out, {"noise_step": ystep, "noise_step_condition": ycond}


# ---------------------------------------------------------------------------
# Head: skip/sqrt(N) -> 1x1 conv -> ReLU -> 1x1 conv (fused)
# ---------------------------------------------------------------------------
def _make_head_kernel(scale):
    def kernel(skip_ref, w1_ref, b1_ref, w2_ref, b2_ref, out_ref):
        s = skip_ref[...] * scale
        h = jnp.dot(w1_ref[...], s, preferred_element_type=jnp.float32) + b1_ref[...]
        h = jnp.maximum(h, 0.0)
        o = jnp.dot(w2_ref[...], h, preferred_element_type=jnp.float32) + b2_ref[...]
        out_ref[...] = o
    return kernel


def head_apply(hp, skip, n_layers):
    batch, n_ch, length = skip.shape
    n_mel = hp["w_out"].shape[0]
    kern = _make_head_kernel(1.0 / math.sqrt(float(n_layers)))
    return pl.pallas_call(
        kern,
        grid=(batch,),
        out_shape=jax.ShapeDtypeStruct((batch, n_mel, length), jnp.float32),
        in_specs=[
            pl.BlockSpec((None, n_ch, length), lambda b: (b, 0, 0)),
            pl.BlockSpec((n_ch, n_ch), lambda b: (0, 0)),
            pl.BlockSpec((n_ch, 1), lambda b: (0, 0)),
            pl.BlockSpec((n_mel, n_ch), lambda b: (0, 0)),
            pl.BlockSpec((n_mel, 1), lambda b: (0, 0)),
        ],
        out_specs=pl.BlockSpec((None, n_mel, length), lambda b: (b, 0, 0)),
        compiler_params=pltpu.CompilerParams(dimension_semantics=("arbitrary",)),
    )(skip, hp["w_skip"], hp["b_skip"], hp["w_out"], hp["b_out"])


# ---------------------------------------------------------------------------
# Full DiffSVC forward
# ---------------------------------------------------------------------------
def diffsvc_forward(params, cfg, mel_spec, conditioner, diffusion_step):
    stats = {}
    x = mel_preprocess(params["mel_pre"], mel_spec)                 # [B, C, L]

    step_out, step_stats = step_encoder_forward(params["step"], diffusion_step)
    stats.update(step_stats)

    batch = x.shape[0]
    fc = step_out.shape[-1]
    step_col = step_out.reshape(batch, fc, 1)                       # [B, FC, 1]
    cond_t = jnp.swapaxes(conditioner, 1, 2)                        # [B, n_bin, L]

    skip = None
    layer_stats = []
    for i, lp in enumerate(params["layers"]):
        dilation = 2 ** (i % cfg["dilation_cycle_length"])
        x, skip, st = residual_block_apply(
            lp, x, step_col, cond_t, skip,
            dilation=dilation, kernel_size=cfg["residual_kernel_size"])
        layer_stats.append(st)
    stats["residual_layers_stats_all_layers"] = layer_stats

    y = head_apply(params["head"], skip, len(params["layers"]))     # [B, n_mel, L]
    return jnp.swapaxes(y, 1, 2), stats                             # [B, L, n_mel]


# ---------------------------------------------------------------------------
# Parameter construction (deterministic; shapes match the nn.Module)
# ---------------------------------------------------------------------------
def init_params(key, cfg):
    n_mel = cfg["n_mel"]
    n_ch = cfg["residual_channels"]
    n_bin = cfg["conditioner_size"]
    fc = cfg["diffusion_fc_size"]
    n_taps = cfg["residual_kernel_size"]
    n_layers = cfg["residual_layer_num"]
    max_steps = cfg["noise_schedule_factors"][2]

    keys = iter(jax.random.split(key, 64))

    def uni(shape, fan_in):
        bound = 1.0 / math.sqrt(float(fan_in))
        return jax.random.uniform(next(keys), shape, jnp.float32, -bound, bound)

    # Step encoder (w1/w2 stored as [in, out] so the kernel does x @ w).
    step = {
        "embedding": build_embedding(max_steps),
        "w1": uni((128, fc), 128), "b1": uni((1, fc), 128),
        "w2": uni((fc, fc), fc), "b2": uni((1, fc), fc),
    }
    # Precompute the MLP output for every integer step with ONE batched Pallas pass.
    step["out_table"] = _run_step_mlp(step, step["embedding"])      # [max_steps, fc]

    mel_pre = {"w": uni((n_ch, n_mel), n_mel), "b": uni((n_ch, 1), n_mel)}

    layers = []
    for _ in range(n_layers):
        layers.append({
            "wd": uni((n_ch, fc), fc),                  "bd": uni((n_ch, 1), fc),
            "wdil": uni((n_taps, 2 * n_ch, n_ch), n_ch * n_taps),
            "bdil": uni((2 * n_ch, 1), n_ch * n_taps),
            "wcond": uni((2 * n_ch, n_bin), n_bin),     "bcond": uni((2 * n_ch, 1), n_bin),
            "wout": uni((2 * n_ch, n_ch), n_ch),        "bout": uni((2 * n_ch, 1), n_ch),
        })

    head = {
        "w_skip": uni((n_ch, n_ch), n_ch), "b_skip": uni((n_ch, 1), n_ch),
        "w_out": jnp.zeros((n_mel, n_ch), jnp.float32),   # torch: nn.init.zeros_
        "b_out": uni((n_mel, 1), n_ch),
    }
    return {"step": step, "mel_pre": mel_pre, "layers": layers, "head": head}


# ---------------------------------------------------------------------------
# Pure-JAX reference for verification
# ---------------------------------------------------------------------------
def _reference_forward(params, cfg, mel, cond, steps):
    sp = params["step"]
    n_steps = sp["embedding"].shape[0]
    if jnp.issubdtype(steps.dtype, jnp.integer):
        emb = sp["embedding"][steps]
    else:
        low_f = jnp.floor(steps)
        low = sp["embedding"][jnp.clip(low_f, 0, n_steps - 1).astype(jnp.int32)]
        high = sp["embedding"][jnp.clip(jnp.ceil(steps), 0, n_steps - 1).astype(jnp.int32)]
        emb = low + (high - low) * (steps - low_f)[..., None]
    h = emb @ sp["w1"] + sp["b1"]
    h = h * jax.nn.sigmoid(h)
    h = h @ sp["w2"] + sp["b2"]
    step_fc = h * jax.nn.sigmoid(h)                                 # [B, 1, FC]

    xm = jnp.swapaxes(mel, 1, 2)                                    # [B, n_mel, L]
    x = jnp.einsum("cm,bml->bcl", params["mel_pre"]["w"], xm) + params["mel_pre"]["b"][None]
    x = jnp.maximum(x, 0.0)

    cond_t = jnp.swapaxes(cond, 1, 2)                               # [B, n_bin, L]
    n_ch = cfg["residual_channels"]
    k_size = cfg["residual_kernel_size"]
    skip = None
    for i, lp in enumerate(params["layers"]):
        d = 2 ** (i % cfg["dilation_cycle_length"])
        pad = (k_size - 1) // 2 if d == 1 else d
        proj = jnp.einsum("bof,cf->boc", step_fc, lp["wd"]) + lp["bd"][:, 0][None, None, :]
        y = x + jnp.swapaxes(proj, 1, 2)
        w_conv = jnp.transpose(lp["wdil"], (1, 2, 0))               # [2C, C, K]
        conv = lax.conv_general_dilated(
            y, w_conv, window_strides=(1,), padding=[(pad, pad)],
            rhs_dilation=(d,), dimension_numbers=("NCH", "OIH", "NCH"))
        conv = conv + lp["bdil"][None]
        cproj = jnp.einsum("om,bml->bol", lp["wcond"], cond_t) + lp["bcond"][None]
        z = conv + cproj
        gate, filt = z[:, :n_ch], z[:, n_ch:]
        g = jax.nn.sigmoid(gate) * jnp.tanh(filt)
        o = jnp.einsum("oc,bcl->bol", lp["wout"], g) + lp["bout"][None]
        residual, sk = o[:, :n_ch], o[:, n_ch:]
        x = (x + residual) / math.sqrt(2.0)
        skip = sk if skip is None else skip + sk

    skip = skip / math.sqrt(float(len(params["layers"])))
    hp = params["head"]
    h = jnp.maximum(jnp.einsum("oc,bcl->bol", hp["w_skip"], skip) + hp["b_skip"][None], 0.0)
    o = jnp.einsum("mc,bcl->bml", hp["w_out"], h) + hp["b_out"][None]
    return jnp.swapaxes(o, 1, 2)


# ---------------------------------------------------------------------------
# Demo / verification
# ---------------------------------------------------------------------------
if __name__ == "__main__":
    key = jax.random.PRNGKey(0)
    kp, km, kc, ks, kw = jax.random.split(key, 5)

    params = init_params(kp, CFG)
    # torch zero-inits the final output projection weight; override for a
    # meaningful end-to-end numerical check (forward semantics unchanged).
    params["head"]["w_out"] = 0.05 * jax.random.normal(
        kw, params["head"]["w_out"].shape, jnp.float32)

    batch, n_frames = 2, 128
    mel = jax.random.normal(km, (batch, n_frames, CFG["n_mel"]), jnp.float32)
    cond = jax.random.normal(kc, (batch, n_frames, CFG["conditioner_size"]), jnp.float32)
    max_steps = CFG["noise_schedule_factors"][2]
    steps_int = jax.random.randint(ks, (batch, 1), 0, max_steps, dtype=jnp.int32)

    fwd = jax.jit(lambda p, m, c, t: diffsvc_forward(p, CFG, m, c, t))
    out, stats = fwd(params, mel, cond, steps_int)
    out = jax.block_until_ready(out)

    assert out.shape == (batch, n_frames, CFG["n_mel"])
    assert stats["step_embedding"].shape == (batch, 1, 128)
    assert stats["step_encoder_output"].shape == (batch, 1, CFG["diffusion_fc_size"])

    with jax.default_matmul_precision("highest"):
        ref = _reference_forward(params, CFG, mel, cond, steps_int)
    err = float(jnp.max(jnp.abs(out - ref)))
    assert jnp.allclose(out, ref, atol=2e-3, rtol=2e-3), f"DiffSVC mismatch, max err {err}"

    # Float-step (lerp) path of the step encoder, checked against its reference.
    steps_f = jnp.array([[3.7], [55.25]], jnp.float32)
    enc_out, enc_stats = step_encoder_forward(params["step"], steps_f)
    enc_out = jax.block_until_ready(enc_out)
    sp = params["step"]
    low_f = jnp.floor(steps_f)
    low_e = sp["embedding"][low_f.astype(jnp.int32)]
    high_e = sp["embedding"][jnp.ceil(steps_f).astype(jnp.int32)]
    emb_ref = low_e + (high_e - low_e) * (steps_f - low_f)[..., None]
    h = emb_ref @ sp["w1"] + sp["b1"]
    h = h * jax.nn.sigmoid(h)
    h = h @ sp["w2"] + sp["b2"]
    enc_ref = h * jax.nn.sigmoid(h)
    assert jnp.allclose(enc_stats["step_embedding"], emb_ref, atol=1e-4, rtol=1e-4)
    assert jnp.allclose(enc_out, enc_ref, atol=1e-3, rtol=1e-3)

    print("KERNEL_OK")
</pallas_src>

<mosaic_0001>
module attributes {stable_mosaic.version = 11 : i64} {
  func.func @_step_mlp_kernel(%arg0: memref<100x128xf32, #tpu.memory_space<vmem>>, %arg1: memref<128x32xf32, #tpu.memory_space<vmem>>, %arg2: memref<1x32xf32, #tpu.memory_space<vmem>>, %arg3: memref<32x32xf32, #tpu.memory_space<vmem>>, %arg4: memref<1x32xf32, #tpu.memory_space<vmem>>, %arg5: memref<100x32xf32, #tpu.memory_space<vmem>>) attributes {dimension_semantics = [], scalar_prefetch = 0 : i64, scratch_operands = 0 : i64, tpu.core_type = #tpu.core_type<tc>} {
    %c0 = arith.constant 0 : index
    %c0_0 = arith.constant 0 : index
    %0 = vector.load %arg0[%c0, %c0_0] : memref<100x128xf32, #tpu.memory_space<vmem>>, vector<100x128xf32>
    %c0_1 = arith.constant 0 : index
    %c0_2 = arith.constant 0 : index
    %1 = vector.load %arg1[%c0_1, %c0_2] : memref<128x32xf32, #tpu.memory_space<vmem>>, vector<128x32xf32>
    %cst = arith.constant dense<0.000000e+00> : vector<100x32xf32>
    %2 = tpu.matmul %0, %1, %cst {dimension_numbers = #tpu.dot_dimension_numbers<[1], [0], [0], [1], [0, 0, 1, 1], [], []>} : vector<100x128xf32>, vector<128x32xf32>, vector<100x32xf32> -> vector<100x32xf32>
    %c0_3 = arith.constant 0 : index
    %c0_4 = arith.constant 0 : index
    %3 = vector.load %arg2[%c0_3, %c0_4] : memref<1x32xf32, #tpu.memory_space<vmem>>, vector<1x32xf32>
    %4 = vector.broadcast %3 : vector<1x32xf32> to vector<100x32xf32>
    %5 = arith.addf %2, %4 : vector<100x32xf32>
    %6 = arith.negf %5 : vector<100x32xf32>
    %7 = math.exp %6 : vector<100x32xf32>
    %cst_5 = arith.constant 1.000000e+00 : f32
    %8 = vector.broadcast %cst_5 : f32 to vector<100x32xf32>
    %9 = arith.addf %8, %7 : vector<100x32xf32>
    %10 = arith.divf %8, %9 : vector<100x32xf32>
    %11 = arith.mulf %5, %10 : vector<100x32xf32>
    %c0_6 = arith.constant 0 : index
    %c0_7 = arith.constant 0 : index
    %12 = vector.load %arg3[%c0_6, %c0_7] : memref<32x32xf32, #tpu.memory_space<vmem>>, vector<32x32xf32>
    %cst_8 = arith.constant dense<0.000000e+00> : vector<100x32xf32>
    %13 = tpu.matmul %11, %12, %cst_8 {dimension_numbers = #tpu.dot_dimension_numbers<[1], [0], [0], [1], [0, 0, 1, 1], [], []>} : vector<100x32xf32>, vector<32x32xf32>, vector<100x32xf32> -> vector<100x32xf32>
    %c0_9 = arith.constant 0 : index
    %c0_10 = arith.constant 0 : index
    %14 = vector.load %arg4[%c0_9, %c0_10] : memref<1x32xf32, #tpu.memory_space<vmem>>, vector<1x32xf32>
    %15 = vector.broadcast %14 : vector<1x32xf32> to vector<100x32xf32>
    %16 = arith.addf %13, %15 : vector<100x32xf32>
    %17 = arith.negf %16 : vector<100x32xf32>
    %18 = math.exp %17 : vector<100x32xf32>
    %cst_11 = arith.constant 1.000000e+00 : f32
    %19 = vector.broadcast %cst_11 : f32 to vector<100x32xf32>
    %20 = arith.addf %19, %18 : vector<100x32xf32>
    %21 = arith.divf %19, %20 : vector<100x32xf32>
    %22 = arith.mulf %16, %21 : vector<100x32xf32>
    %c0_12 = arith.constant 0 : index
    %c0_13 = arith.constant 0 : index
    %23 = vector.load %arg5[%c0_12, %c0_13] : memref<100x32xf32, #tpu.memory_space<vmem>>, vector<100x32xf32>
    tpu.vector_store %arg5[%c0_12, %c0_13], %22 {strides = array<i32>} : memref<100x32xf32, #tpu.memory_space<vmem>>, vector<100x32xf32>,
    return
  }
}

</mosaic_0001>

<llo_original>
// kernel: tpu_custom_call.1
$region0: #{tpu_custom_call.1}
  #allocation0 [shape = 'u32[]', space=smem, size = 0x4, offset = 0x4, fixed_abs, tag = 'smem constant byte address 0x4 - core index']
  #allocation1 [shape = 'u32[144,128]{1,0:T(1,128)}', space=vmem, size = 0x12000, scoped, tag = 'internal scratch']
  %s0 = inlined_call_operand.vmem [shape: f32[100,128], index: 0, kind: input, shape index: {}]
  %s1 = inlined_call_operand.vmem [shape: f32[128,32], index: 1, kind: input, shape index: {}]
  %s2 = inlined_call_operand.vmem [shape: f32[1,32], index: 2, kind: input, shape index: {}]
  %s3 = inlined_call_operand.vmem [shape: f32[32,32], index: 3, kind: input, shape index: {}]
  %s4 = inlined_call_operand.vmem [shape: f32[1,32], index: 4, kind: input, shape index: {}]
  %s5 = inlined_call_operand.vmem [shape: f32[100,32], index: 5, kind: output, shape index: {}]
  %s6 = sld [smem:[#allocation0]]
  $region30: #{tpu_custom_call.1} parent=0
    _
  %s8 = ssub.s32 1, %s6
  %s9 = scalar_select 0, %s8, %s6
  // Predicated region
  $region2: #{tpu_custom_call.1} parent=0 // pred_check
    _
  $region3: #{tpu_custom_call.1} parent=0 // pred_check_branch
    %11 = sbr.rel (0) target = $region5
  $region4: #{tpu_custom_call.1} parent=0 // pred_region
    _
  $region5: #{tpu_custom_call.1} parent=0 // pred_fallthru
    _
  // Predicated region
  $region6: #{tpu_custom_call.1} parent=0 // pred_check
    _
  $region7: #{tpu_custom_call.1} parent=0 // pred_check_branch
    %13 = sbr.rel (0) target = $region9
  $region8: #{tpu_custom_call.1} parent=0 // pred_region
    _
  $region9: #{tpu_custom_call.1} parent=0 // pred_fallthru
    _
  // Predicated region
  $region10: #{tpu_custom_call.1} parent=0 // pred_check
    _
  $region11: #{tpu_custom_call.1} parent=0 // pred_check_branch
    %15 = sbr.rel (0) target = $region13
  $region12: #{tpu_custom_call.1} parent=0 // pred_region
    _
  $region13: #{tpu_custom_call.1} parent=0 // pred_fallthru
    _
  // Predicated region
  $region14: #{tpu_custom_call.1} parent=0 // pred_check
    _
  $region15: #{tpu_custom_call.1} parent=0 // pred_check_branch
    %17 = sbr.rel (0) target = $region17
  $region16: #{tpu_custom_call.1} parent=0 // pred_region
    _
  $region17: #{tpu_custom_call.1} parent=0 // pred_fallthru
    _
  // Predicated region
  $region18: #{tpu_custom_call.1} parent=0 // pred_check
    _
  $region19: #{tpu_custom_call.1} parent=0 // pred_check_branch
    %19 = sbr.rel (0) target = $region21
  $region20: #{tpu_custom_call.1} parent=0 // pred_region
    _
  $region21: #{tpu_custom_call.1} parent=0 // pred_fallthru
    _
  %v20 = vld [vmem:[%s0] sm:$0xff]
  %v21 = vld [vmem:[%s0 + $0x8] sm:$0xff]
  %v22 = vld [vmem:[%s0 + $0x10] sm:$0xff]
  %v23 = vld [vmem:[%s0 + $0x18] sm:$0xff]
  %v24 = vld [vmem:[%s0 + $0x20] sm:$0xff]
  %v25 = vld [vmem:[%s0 + $0x28] sm:$0xff]
  %v26 = vld [vmem:[%s0 + $0x30] sm:$0xff]
  %v27 = vld [vmem:[%s0 + $0x38] sm:$0xff]
  %v28 = vld [vmem:[%s0 + $0x40] sm:$0xff]
  %v29 = vld [vmem:[%s0 + $0x48] sm:$0xff]
  %v30 = vld [vmem:[%s0 + $0x50] sm:$0xff]
  %v31 = vld [vmem:[%s0 + $0x58] sm:$0xff]
  %v32 = vld [vmem:[%s0 + $0x60] sm:$0xf]
  %v33 = vld [vmem:[%s1] sm:$0xff]
  %v34 = vld [vmem:[%s1 + $0x8] sm:$0xff]
  %v35 = vld [vmem:[%s1 + $0x10] sm:$0xff]
  %v36 = vld [vmem:[%s1 + $0x18] sm:$0xff]
  %v37 = vld [vmem:[%s1 + $0x20] sm:$0xff]
  %v38 = vld [vmem:[%s1 + $0x28] sm:$0xff]
  %v39 = vld [vmem:[%s1 + $0x30] sm:$0xff]
  %v40 = vld [vmem:[%s1 + $0x38] sm:$0xff]
  %v41 = vld [vmem:[%s1 + $0x40] sm:$0xff]
  %v42 = vld [vmem:[%s1 + $0x48] sm:$0xff]
  %v43 = vld [vmem:[%s1 + $0x50] sm:$0xff]
  %v44 = vld [vmem:[%s1 + $0x58] sm:$0xff]
  %v45 = vld [vmem:[%s1 + $0x60] sm:$0xff]
  %v46 = vld [vmem:[%s1 + $0x68] sm:$0xff]
  %v47 = vld [vmem:[%s1 + $0x70] sm:$0xff]
  %v48 = vld [vmem:[%s1 + $0x78] sm:$0xff]
  %v49 = vld [vmem:[%s2] sm:$0x1]
  %v51 = vlaneseq
  %v52 = vshrl.u32 %v51, 7
  %v53 = vsub.s32 0, %v52
  %v54 = vrot.slane %v49, %v53
  %56 = vmatprep.subr.mxu0 0.0
  %57 = vmatpush1.msra.mxu0 %v33
  %58 = vmatprep.subr.mxu0 0.0
  %59 = vmatpush1.msra.mxu0 %v34
  %60 = vmatprep.subr.mxu0 0.0
  %61 = vmatpush1.msra.mxu0 %v35
  %62 = vmatprep.subr.mxu0 0.0
  %63 = vmatpush1.msra.mxu0 %v36
  %64 = vmatprep.subr.mxu0 0.0
  %65 = vmatpush1.msra.mxu0 %v37
  %66 = vmatprep.subr.mxu0 0.0
  %67 = vmatpush1.msra.mxu0 %v38
  %68 = vmatprep.subr.mxu0 0.0
  %69 = vmatpush1.msra.mxu0 %v39
  %70 = vmatprep.subr.mxu0 0.0
  %71 = vmatpush1.msra.mxu0 %v40
  %72 = vmatprep.subr.mxu0 0.0
  %73 = vmatpush1.msra.mxu0 %v41
  %74 = vmatprep.subr.mxu0 0.0
  %75 = vmatpush1.msra.mxu0 %v42
  %76 = vmatprep.subr.mxu0 0.0
  %77 = vmatpush1.msra.mxu0 %v43
  %78 = vmatprep.subr.mxu0 0.0
  %79 = vmatpush1.msra.mxu0 %v44
  %80 = vmatprep.subr.mxu0 0.0
  %81 = vmatpush1.msra.mxu0 %v45
  %82 = vmatprep.subr.mxu0 0.0
  %83 = vmatpush1.msra.mxu0 %v46
  %84 = vmatprep.subr.mxu0 0.0
  %85 = vmatpush1.msra.mxu0 %v47
  %86 = vmatprep.subr.mxu0 0.0
  %87 = vmatpush1.msra.mxu0 %v48
  %88 = vmatprep.subr.mxu0 0.0
  %89 = vmatpush1.msra.mxu0 0.0
  %90 = vmatprep.subr.mxu0 0.0
  %91 = vmatpush1.msra.mxu0 0.0
  %92 = vmatprep.subr.mxu0 0.0
  %93 = vmatpush1.msra.mxu0 0.0
  %94 = vmatprep.subr.mxu0 0.0
  %95 = vmatpush1.msra.mxu0 0.0
  %96 = vmatprep.subr.mxu0 0.0
  %97 = vmatpush1.msra.mxu0 0.0
  %98 = vmatprep.subr.mxu0 0.0
  %99 = vmatpush1.msra.mxu0 0.0
  %100 = vmatprep.subr.mxu0 0.0
  %101 = vmatpush1.msra.mxu0 0.0
  %102 = vmatprep.subr.mxu0 0.0
  %103 = vmatpush1.msra.mxu0 0.0
  %104 = vmatprep.subr.mxu0 0.0
  %105 = vmatpush1.msra.mxu0 0.0
  %106 = vmatprep.subr.mxu0 0.0
  %107 = vmatpush1.msra.mxu0 0.0
  %108 = vmatprep.subr.mxu0 0.0
  %109 = vmatpush1.msra.mxu0 0.0
  %110 = vmatprep.subr.mxu0 0.0
  %111 = vmatpush1.msra.mxu0 0.0
  %112 = vmatprep.subr.mxu0 0.0
  %113 = vmatpush1.msra.mxu0 0.0
  %114 = vmatprep.subr.mxu0 0.0
  %115 = vmatpush1.msra.mxu0 0.0
  %116 = vmatprep.subr.mxu0 0.0
  %117 = vmatpush1.msra.mxu0 0.0
  %118 = vmatprep.subr.mxu0 0.0
  %119 = vmatpush1.msra.mxu0 0.0
  %120 = vmatprep.mubr.f32.mxu0 0.0
  %121 = vmatmul.mubr.f32.gmra.mrb[0].mxu0 %v20
  %v122 = vpop.f32.mrb[0].mxu0
  %v123 = vadd.f32 %v54, %v122
  %v124 = vpop.f32.mrb[0].mxu0
  %125 = vmatprep.mubr.f32.mxu0 0.0
  %126 = vmatmul.mubr.f32.gmra.mrb[0].mxu0 %v21
  %v127 = vpop.f32.mrb[0].mxu0
  %v128 = vadd.f32 %v54, %v127
  %v129 = vpop.f32.mrb[0].mxu0
  %130 = vmatprep.mubr.f32.mxu0 0.0
  %131 = vmatmul.mubr.f32.gmra.mrb[0].mxu0 %v22
  %v132 = vpop.f32.mrb[0].mxu0
  %v133 = vadd.f32 %v54, %v132
  %v134 = vpop.f32.mrb[0].mxu0
  %135 = vmatprep.mubr.f32.mxu0 0.0
  %136 = vmatmul.mubr.f32.gmra.mrb[0].mxu0 %v23
  %v137 = vpop.f32.mrb[0].mxu0
  %v138 = vadd.f32 %v54, %v137
  %v139 = vpop.f32.mrb[0].mxu0
  %140 = vmatprep.mubr.f32.mxu0 0.0
  %141 = vmatmul.mubr.f32.gmra.mrb[0].mxu0 %v24
  %v142 = vpop.f32.mrb[0].mxu0
  %v143 = vadd.f32 %v54, %v142
  %v144 = vpop.f32.mrb[0].mxu0
  %145 = vmatprep.mubr.f32.mxu0 0.0
  %146 = vmatmul.mubr.f32.gmra.mrb[0].mxu0 %v25
  %v147 = vpop.f32.mrb[0].mxu0
  %v148 = vadd.f32 %v54, %v147
  %v149 = vpop.f32.mrb[0].mxu0
  %150 = vmatprep.mubr.f32.mxu0 0.0
  %151 = vmatmul.mubr.f32.gmra.mrb[0].mxu0 %v26
  %v152 = vpop.f32.mrb[0].mxu0
  %v153 = vadd.f32 %v54, %v152
  %v154 = vpop.f32.mrb[0].mxu0
  %155 = vmatprep.mubr.f32.mxu0 0.0
  %156 = vmatmul.mubr.f32.gmra.mrb[0].mxu0 %v27
  %v157 = vpop.f32.mrb[0].mxu0
  %v158 = vadd.f32 %v54, %v157
  %v159 = vpop.f32.mrb[0].mxu0
  %160 = vmatprep.mubr.f32.mxu0 0.0
  %161 = vmatmul.mubr.f32.gmra.mrb[0].mxu0 %v28
  %v162 = vpop.f32.mrb[0].mxu0
  %v163 = vadd.f32 %v54, %v162
  %v164 = vpop.f32.mrb[0].mxu0
  %165 = vmatprep.mubr.f32.mxu0 0.0
  %166 = vmatmul.mubr.f32.gmra.mrb[0].mxu0 %v29
  %v167 = vpop.f32.mrb[0].mxu0
  %v168 = vadd.f32 %v54, %v167
  %v169 = vpop.f32.mrb[0].mxu0
  %170 = vmatprep.mubr.f32.mxu0 0.0
  %171 = vmatmul.mubr.f32.gmra.mrb[0].mxu0 %v30
  %v172 = vpop.f32.mrb[0].mxu0
  %v173 = vadd.f32 %v54, %v172
  %v174 = vpop.f32.mrb[0].mxu0
  %175 = vmatprep.mubr.f32.mxu0 0.0
  %176 = vmatmul.mubr.f32.gmra.mrb[0].mxu0 %v31
  %v177 = vpop.f32.mrb[0].mxu0
  %v178 = vadd.f32 %v54, %v177
  %v179 = vpop.f32.mrb[0].mxu0
  %180 = vmatprep.mubr.f32.mxu0 0.0
  %181 = vmatmul.mubr.f32.gmra.mrb[0].mxu0 %v32
  %v182 = vpop.f32.mrb[0].mxu0
  %v183 = vadd.f32 %v54, %v182
  %v184 = vpop.f32.mrb[0].mxu0
  %185 = vdwg.mxu0
  %v186 = vxor.u32 %v123, 2147483648
  %v187 = vxor.u32 %v128, 2147483648
  %v188 = vxor.u32 %v133, 2147483648
  %v189 = vxor.u32 %v138, 2147483648
  %v190 = vxor.u32 %v143, 2147483648
  %v191 = vxor.u32 %v148, 2147483648
  %v192 = vxor.u32 %v153, 2147483648
  %v193 = vxor.u32 %v158, 2147483648
  %v194 = vxor.u32 %v163, 2147483648
  %v195 = vxor.u32 %v168, 2147483648
  %v196 = vxor.u32 %v173, 2147483648
  %v197 = vxor.u32 %v178, 2147483648
  %v198 = vxor.u32 %v183, 2147483648
  %v199 = vmul.f32 %v186, 1.442695
  %v200 = vpow.pop %v199
  %v201 = vmul.f32 %v187, 1.442695
  %v202 = vpow.pop %v201
  %v203 = vmul.f32 %v188, 1.442695
  %v204 = vpow.pop %v203
  %v205 = vmul.f32 %v189, 1.442695
  %v206 = vpow.pop %v205
  %v207 = vmul.f32 %v190, 1.442695
  %v208 = vpow.pop %v207
  %v209 = vmul.f32 %v191, 1.442695
  %v210 = vpow.pop %v209
  %v211 = vmul.f32 %v192, 1.442695
  %v212 = vpow.pop %v211
  %v213 = vmul.f32 %v193, 1.442695
  %v214 = vpow.pop %v213
  %v215 = vmul.f32 %v194, 1.442695
  %v216 = vpow.pop %v215
  %v217 = vmul.f32 %v195, 1.442695
  %v218 = vpow.pop %v217
  %v219 = vmul.f32 %v196, 1.442695
  %v220 = vpow.pop %v219
  %v221 = vmul.f32 %v197, 1.442695
  %v222 = vpow.pop %v221
  %v223 = vmul.f32 %v198, 1.442695
  %v224 = vpow.pop %v223
  %v225 = vadd.f32 %v200, 1.0
  %v226 = vadd.f32 %v202, 1.0
  %v227 = vadd.f32 %v204, 1.0
  %v228 = vadd.f32 %v206, 1.0
  %v229 = vadd.f32 %v208, 1.0
  %v230 = vadd.f32 %v210, 1.0
  %v231 = vadd.f32 %v212, 1.0
  %v232 = vadd.f32 %v214, 1.0
  %v233 = vadd.f32 %v216, 1.0
  %v234 = vadd.f32 %v218, 1.0
  %v235 = vadd.f32 %v220, 1.0
  %v236 = vadd.f32 %v222, 1.0
  %v237 = vadd.f32 %v224, 1.0
  %v238 = vrcp.pop %v225
  %v239 = vmul.f32 1.0, %v238
  %v240 = vrcp.pop %v226
  %v241 = vmul.f32 1.0, %v240
  %v242 = vrcp.pop %v227
  %v243 = vmul.f32 1.0, %v242
  %v244 = vrcp.pop %v228
  %v245 = vmul.f32 1.0, %v244
  %v246 = vrcp.pop %v229
  %v247 = vmul.f32 1.0, %v246
  %v248 = vrcp.pop %v230
  %v249 = vmul.f32 1.0, %v248
  %v250 = vrcp.pop %v231
  %v251 = vmul.f32 1.0, %v250
  %v252 = vrcp.pop %v232
  %v253 = vmul.f32 1.0, %v252
  %v254 = vrcp.pop %v233
  %v255 = vmul.f32 1.0, %v254
  %v256 = vrcp.pop %v234
  %v257 = vmul.f32 1.0, %v256
  %v258 = vrcp.pop %v235
  %v259 = vmul.f32 1.0, %v258
  %v260 = vrcp.pop %v236
  %v261 = vmul.f32 1.0, %v260
  %v262 = vrcp.pop %v237
  %v263 = vmul.f32 1.0, %v262
  %v264 = vmul.f32 %v123, %v239
  %v265 = vmul.f32 %v128, %v241
  %v266 = vmul.f32 %v133, %v243
  %v267 = vmul.f32 %v138, %v245
  %v268 = vmul.f32 %v143, %v247
  %v269 = vmul.f32 %v148, %v249
  %v270 = vmul.f32 %v153, %v251
  %v271 = vmul.f32 %v158, %v253
  %v272 = vmul.f32 %v163, %v255
  %v273 = vmul.f32 %v168, %v257
  %v274 = vmul.f32 %v173, %v259
  %v275 = vmul.f32 %v178, %v261
  %v276 = vmul.f32 %v183, %v263
  %v277 = vld [vmem:[%s3] sm:$0xff]
  %v278 = vld [vmem:[%s3 + $0x8] sm:$0xff]
  %v279 = vld [vmem:[%s3 + $0x10] sm:$0xff]
  %v280 = vld [vmem:[%s3 + $0x18] sm:$0xff]
  %v281 = vld [vmem:[%s4] sm:$0x1]
  %v283 = vlaneseq
  %v284 = vshrl.u32 %v283, 7
  %v285 = vsub.s32 0, %v284
  %v286 = vrot.slane %v281, %v285
  %vm288 = vcmask 261120
  %v290 = vsel %vm288, %v264, 0
  %v293 = vsel %vm288, %v265, 0
  %v296 = vsel %vm288, %v266, 0
  %v299 = vsel %vm288, %v267, 0
  %v302 = vsel %vm288, %v268, 0
  %v305 = vsel %vm288, %v269, 0
  %v308 = vsel %vm288, %v270, 0
  %v311 = vsel %vm288, %v271, 0
  %v314 = vsel %vm288, %v272, 0
  %v317 = vsel %vm288, %v273, 0
  %v320 = vsel %vm288, %v274, 0
  %v323 = vsel %vm288, %v275, 0
  %v326 = vsel %vm288, %v276, 0
  %328 = vmatprep.subr.mxu0 0.0
  %329 = vmatpush1.msra.mxu0 %v277
  %330 = vmatprep.subr.mxu0 0.0
  %331 = vmatpush1.msra.mxu0 %v278
  %332 = vmatprep.subr.mxu0 0.0
  %333 = vmatpush1.msra.mxu0 %v279
  %334 = vmatprep.subr.mxu0 0.0
  %335 = vmatpush1.msra.mxu0 %v280
  %336 = vmatprep.subr.mxu0 0.0
  %337 = vmatpush1.msra.mxu0 0.0
  %338 = vmatprep.subr.mxu0 0.0
  %339 = vmatpush1.msra.mxu0 0.0
  %340 = vmatprep.subr.mxu0 0.0
  %341 = vmatpush1.msra.mxu0 0.0
  %342 = vmatprep.subr.mxu0 0.0
  %343 = vmatpush1.msra.mxu0 0.0
  %344 = vmatprep.subr.mxu0 0.0
  %345 = vmatpush1.msra.mxu0 0.0
  %346 = vmatprep.subr.mxu0 0.0
  %347 = vmatpush1.msra.mxu0 0.0
  %348 = vmatprep.subr.mxu0 0.0
  %349 = vmatpush1.msra.mxu0 0.0
  %350 = vmatprep.subr.mxu0 0.0
  %351 = vmatpush1.msra.mxu0 0.0
  %352 = vmatprep.subr.mxu0 0.0
  %353 = vmatpush1.msra.mxu0 0.0
  %354 = vmatprep.subr.mxu0 0.0
  %355 = vmatpush1.msra.mxu0 0.0
  %356 = vmatprep.subr.mxu0 0.0
  %357 = vmatpush1.msra.mxu0 0.0
  %358 = vmatprep.subr.mxu0 0.0
  %359 = vmatpush1.msra.mxu0 0.0
  %360 = vmatprep.subr.mxu0 0.0
  %361 = vmatpush1.msra.mxu0 0.0
  %362 = vmatprep.subr.mxu0 0.0
  %363 = vmatpush1.msra.mxu0 0.0
  %364 = vmatprep.subr.mxu0 0.0
  %365 = vmatpush1.msra.mxu0 0.0
  %366 = vmatprep.subr.mxu0 0.0
  %367 = vmatpush1.msra.mxu0 0.0
  %368 = vmatprep.subr.mxu0 0.0
  %369 = vmatpush1.msra.mxu0 0.0
  %370 = vmatprep.subr.mxu0 0.0
  %371 = vmatpush1.msra.mxu0 0.0
  %372 = vmatprep.subr.mxu0 0.0
  %373 = vmatpush1.msra.mxu0 0.0
  %374 = vmatprep.subr.mxu0 0.0
  %375 = vmatpush1.msra.mxu0 0.0
  %376 = vmatprep.subr.mxu0 0.0
  %377 = vmatpush1.msra.mxu0 0.0
  %378 = vmatprep.subr.mxu0 0.0
  %379 = vmatpush1.msra.mxu0 0.0
  %380 = vmatprep.subr.mxu0 0.0
  %381 = vmatpush1.msra.mxu0 0.0
  %382 = vmatprep.subr.mxu0 0.0
  %383 = vmatpush1.msra.mxu0 0.0
  %384 = vmatprep.subr.mxu0 0.0
  %385 = vmatpush1.msra.mxu0 0.0
  %386 = vmatprep.subr.mxu0 0.0
  %387 = vmatpush1.msra.mxu0 0.0
  %388 = vmatprep.subr.mxu0 0.0
  %389 = vmatpush1.msra.mxu0 0.0
  %390 = vmatprep.subr.mxu0 0.0
  %391 = vmatpush1.msra.mxu0 0.0
  %392 = vmatprep.mubr.f32.mxu0 0.0
  %393 = vmatmul.mubr.f32.gmra.mrb[0].mxu0 %v290
  %v394 = vpop.f32.mrb[0].mxu0
  %v395 = vadd.f32 %v286, %v394
  %v396 = vpop.f32.mrb[0].mxu0
  %397 = vmatprep.mubr.f32.mxu0 0.0
  %398 = vmatmul.mubr.f32.gmra.mrb[0].mxu0 %v293
  %v399 = vpop.f32.mrb[0].mxu0
  %v400 = vadd.f32 %v286, %v399
  %v401 = vpop.f32.mrb[0].mxu0
  %402 = vmatprep.mubr.f32.mxu0 0.0
  %403 = vmatmul.mubr.f32.gmra.mrb[0].mxu0 %v296
  %v404 = vpop.f32.mrb[0].mxu0
  %v405 = vadd.f32 %v286, %v404
  %v406 = vpop.f32.mrb[0].mxu0
  %407 = vmatprep.mubr.f32.mxu0 0.0
  %408 = vmatmul.mubr.f32.gmra.mrb[0].mxu0 %v299
  %v409 = vpop.f32.mrb[0].mxu0
  %v410 = vadd.f32 %v286, %v409
  %v411 = vpop.f32.mrb[0].mxu0
  %412 = vmatprep.mubr.f32.mxu0 0.0
  %413 = vmatmul.mubr.f32.gmra.mrb[0].mxu0 %v302
  %v414 = vpop.f32.mrb[0].mxu0
  %v415 = vadd.f32 %v286, %v414
  %v416 = vpop.f32.mrb[0].mxu0
  %417 = vmatprep.mubr.f32.mxu0 0.0
  %418 = vmatmul.mubr.f32.gmra.mrb[0].mxu0 %v305
  %v419 = vpop.f32.mrb[0].mxu0
  %v420 = vadd.f32 %v286, %v419
  %v421 = vpop.f32.mrb[0].mxu0
  %422 = vmatprep.mubr.f32.mxu0 0.0
  %423 = vmatmul.mubr.f32.gmra.mrb[0].mxu0 %v308
  %v424 = vpop.f32.mrb[0].mxu0
  %v425 = vadd.f32 %v286, %v424
  %v426 = vpop.f32.mrb[0].mxu0
  %427 = vmatprep.mubr.f32.mxu0 0.0
  %428 = vmatmul.mubr.f32.gmra.mrb[0].mxu0 %v311
  %v429 = vpop.f32.mrb[0].mxu0
  %v430 = vadd.f32 %v286, %v429
  %v431 = vpop.f32.mrb[0].mxu0
  %432 = vmatprep.mubr.f32.mxu0 0.0
  %433 = vmatmul.mubr.f32.gmra.mrb[0].mxu0 %v314
  %v434 = vpop.f32.mrb[0].mxu0
  %v435 = vadd.f32 %v286, %v434
  %v436 = vpop.f32.mrb[0].mxu0
  %437 = vmatprep.mubr.f32.mxu0 0.0
  %438 = vmatmul.mubr.f32.gmra.mrb[0].mxu0 %v317
  %v439 = vpop.f32.mrb[0].mxu0
  %v440 = vadd.f32 %v286, %v439
  %v441 = vpop.f32.mrb[0].mxu0
  %442 = vmatprep.mubr.f32.mxu0 0.0
  %443 = vmatmul.mubr.f32.gmra.mrb[0].mxu0 %v320
  %v444 = vpop.f32.mrb[0].mxu0
  %v445 = vadd.f32 %v286, %v444
  %v446 = vpop.f32.mrb[0].mxu0
  %447 = vmatprep.mubr.f32.mxu0 0.0
  %448 = vmatmul.mubr.f32.gmra.mrb[0].mxu0 %v323
  %v449 = vpop.f32.mrb[0].mxu0
  %v450 = vadd.f32 %v286, %v449
  %v451 = vpop.f32.mrb[0].mxu0
  %452 = vmatprep.mubr.f32.mxu0 0.0
  %453 = vmatmul.mubr.f32.gmra.mrb[0].mxu0 %v326
  %v454 = vpop.f32.mrb[0].mxu0
  %v455 = vadd.f32 %v286, %v454
  %v456 = vpop.f32.mrb[0].mxu0
  %457 = vdwg.mxu0
  %v458 = vxor.u32 %v395, 2147483648
  %v459 = vxor.u32 %v400, 2147483648
  %v460 = vxor.u32 %v405, 2147483648
  %v461 = vxor.u32 %v410, 2147483648
  %v462 = vxor.u32 %v415, 2147483648
  %v463 = vxor.u32 %v420, 2147483648
  %v464 = vxor.u32 %v425, 2147483648
  %v465 = vxor.u32 %v430, 2147483648
  %v466 = vxor.u32 %v435, 2147483648
  %v467 = vxor.u32 %v440, 2147483648
  %v468 = vxor.u32 %v445, 2147483648
  %v469 = vxor.u32 %v450, 2147483648
  %v470 = vxor.u32 %v455, 2147483648
  %v471 = vmul.f32 %v458, 1.442695
  %v472 = vpow.pop %v471
  %v473 = vmul.f32 %v459, 1.442695
  %v474 = vpow.pop %v473
  %v475 = vmul.f32 %v460, 1.442695
  %v476 = vpow.pop %v475
  %v477 = vmul.f32 %v461, 1.442695
  %v478 = vpow.pop %v477
  %v479 = vmul.f32 %v462, 1.442695
  %v480 = vpow.pop %v479
  %v481 = vmul.f32 %v463, 1.442695
  %v482 = vpow.pop %v481
  %v483 = vmul.f32 %v464, 1.442695
  %v484 = vpow.pop %v483
  %v485 = vmul.f32 %v465, 1.442695
  %v486 = vpow.pop %v485
  %v487 = vmul.f32 %v466, 1.442695
  %v488 = vpow.pop %v487
  %v489 = vmul.f32 %v467, 1.442695
  %v490 = vpow.pop %v489
  %v491 = vmul.f32 %v468, 1.442695
  %v492 = vpow.pop %v491
  %v493 = vmul.f32 %v469, 1.442695
  %v494 = vpow.pop %v493
  %v495 = vmul.f32 %v470, 1.442695
  %v496 = vpow.pop %v495
  %v497 = vadd.f32 %v472, 1.0
  %v498 = vadd.f32 %v474, 1.0
  %v499 = vadd.f32 %v476, 1.0
  %v500 = vadd.f32 %v478, 1.0
  %v501 = vadd.f32 %v480, 1.0
  %v502 = vadd.f32 %v482, 1.0
  %v503 = vadd.f32 %v484, 1.0
  %v504 = vadd.f32 %v486, 1.0
  %v505 = vadd.f32 %v488, 1.0
  %v506 = vadd.f32 %v490, 1.0
  %v507 = vadd.f32 %v492, 1.0
  %v508 = vadd.f32 %v494, 1.0
  %v509 = vadd.f32 %v496, 1.0
  %v510 = vrcp.pop %v497
  %v511 = vmul.f32 1.0, %v510
  %v512 = vrcp.pop %v498
  %v513 = vmul.f32 1.0, %v512
  %v514 = vrcp.pop %v499
  %v515 = vmul.f32 1.0, %v514
  %v516 = vrcp.pop %v500
  %v517 = vmul.f32 1.0, %v516
  %v518 = vrcp.pop %v501
  %v519 = vmul.f32 1.0, %v518
  %v520 = vrcp.pop %v502
  %v521 = vmul.f32 1.0, %v520
  %v522 = vrcp.pop %v503
  %v523 = vmul.f32 1.0, %v522
  %v524 = vrcp.pop %v504
  %v525 = vmul.f32 1.0, %v524
  %v526 = vrcp.pop %v505
  %v527 = vmul.f32 1.0, %v526
  %v528 = vrcp.pop %v506
  %v529 = vmul.f32 1.0, %v528
  %v530 = vrcp.pop %v507
  %v531 = vmul.f32 1.0, %v530
  %v532 = vrcp.pop %v508
  %v533 = vmul.f32 1.0, %v532
  %v534 = vrcp.pop %v509
  %v535 = vmul.f32 1.0, %v534
  %v536 = vmul.f32 %v395, %v511
  %v537 = vmul.f32 %v400, %v513
  %v538 = vmul.f32 %v405, %v515
  %v539 = vmul.f32 %v410, %v517
  %v540 = vmul.f32 %v415, %v519
  %v541 = vmul.f32 %v420, %v521
  %v542 = vmul.f32 %v425, %v523
  %v543 = vmul.f32 %v430, %v525
  %v544 = vmul.f32 %v435, %v527
  %v545 = vmul.f32 %v440, %v529
  %v546 = vmul.f32 %v445, %v531
  %v547 = vmul.f32 %v450, %v533
  %v548 = vmul.f32 %v455, %v535
  %549 = vst.msk [vmem:[%s5] sm:$0xff] %vm288, %v536
  %550 = vst.msk [vmem:[%s5 + $0x8] sm:$0xff] %vm288, %v537
  %551 = vst.msk [vmem:[%s5 + $0x10] sm:$0xff] %vm288, %v538
  %552 = vst.msk [vmem:[%s5 + $0x18] sm:$0xff] %vm288, %v539
  %553 = vst.msk [vmem:[%s5 + $0x20] sm:$0xff] %vm288, %v540
  %554 = vst.msk [vmem:[%s5 + $0x28] sm:$0xff] %vm288, %v541
  %555 = vst.msk [vmem:[%s5 + $0x30] sm:$0xff] %vm288, %v542
  %556 = vst.msk [vmem:[%s5 + $0x38] sm:$0xff] %vm288, %v543
  %557 = vst.msk [vmem:[%s5 + $0x40] sm:$0xff] %vm288, %v544
  %558 = vst.msk [vmem:[%s5 + $0x48] sm:$0xff] %vm288, %v545
  %559 = vst.msk [vmem:[%s5 + $0x50] sm:$0xff] %vm288, %v546
  %560 = vst.msk [vmem:[%s5 + $0x58] sm:$0xff] %vm288, %v547
  %vm561 = vcmask 257024
  %562 = vst.msk [vmem:[%s5 + $0x60] sm:$0xf] %vm561, %v548
  // Predicated region
  $region22: #{tpu_custom_call.1} parent=0 // pred_check
    _
  $region23: #{tpu_custom_call.1} parent=0 // pred_check_branch
    %564 = sbr.rel (0) target = $region25
  $region24: #{tpu_custom_call.1} parent=0 // pred_region
    _
  $region25: #{tpu_custom_call.1} parent=0 // pred_fallthru
    _
  // Predicated region
  $region26: #{tpu_custom_call.1} parent=0 // pred_check
    _
  $region27: #{tpu_custom_call.1} parent=0 // pred_check_branch
    %566 = sbr.rel (0) target = $region29
  $region28: #{tpu_custom_call.1} parent=0 // pred_region
    _
  $region29: #{tpu_custom_call.1} parent=0 // pred_fallthru
    _

</llo_original>
